<compile_context>
chip_gen: v6e
topology: v6e:2x2x1
jax: 0.10.0
libtpu: 0.0.40
codegen_flags: <defaults>
</compile_context>

<pallas_src>
import jax
import jax.numpy as jnp
from jax.experimental import pallas as pl
from jax.experimental.pallas import tpu as pltpu


def _conv3x3_relu_kernel(cols_ref, w_ref, b_ref, o_ref):
    """Single grid step, pixels on the lane axis.

    cols_ref : (N, 9*Cin, H*W)  im2col'd input (tap-major, then cin)
    w_ref    : (Cout, 9*Cin)    repacked conv weight
    b_ref    : (Cout, 1)        bias (broadcasts across lanes)
    o_ref    : (N, Cout, H*W)   lane-dense output block
    """
    w = w_ref[...]
    b = b_ref[...]
    # Static (N=2) unrolled loop: one fused MXU matmul per batch element,
    # (Cout, 9*Cin) x (9*Cin, H*W) -> (Cout, H*W), all in one grid step.
    for n in range(cols_ref.shape[0]):
        acc = jnp.dot(w, cols_ref[n],
                      preferred_element_type=jnp.float32,
                      precision=jax.lax.Precision.HIGHEST)
        o_ref[n] = jnp.maximum(acc + b, 0.0)   # bias + ReLU, unmasked 256-lane store


# ---- module parameters (deterministic synthetic init; no checkpoint load) ----
_CIN, _COUT = 4, 8
_kw_key, _kb_key = jax.random.split(jax.random.PRNGKey(42))
_WEIGHT = (jax.random.normal(_kw_key, (_COUT, _CIN, 3, 3), jnp.float32)
           * (1.0 / (3 * 3 * _CIN) ** 0.5))
_BIAS = jax.random.normal(_kb_key, (_COUT,), jnp.float32) * 0.01

# Repack hoisted out of the per-call path (column order = tap-major, then cin,
# matching the im2col stacking below).
_W2 = jnp.transpose(_WEIGHT, (0, 2, 3, 1)).reshape(_COUT, 9 * _CIN)
_B2 = _BIAS.reshape(_COUT, 1)


@jax.jit
def wrapped_forward(x_nchw):
    """Pallas implementation of the wrapped module: Conv2d(3x3, pad=1) + ReLU.

    x_nchw : (N, Cin, H, W) float32  ->  (N, Cout, H, W) float32
    """
    N, Cin, H, W = x_nchw.shape
    HW = H * W
    K = 9 * Cin
    Cout = _W2.shape[0]

    # im2col in native NCHW layout (slices + reshapes only; fuses under jit).
    xpad = jnp.pad(x_nchw, ((0, 0), (0, 0), (1, 1), (1, 1)))  # (N, Cin, H+2, W+2)
    taps = [
        xpad[:, :, kh:kh + H, kw:kw + W].reshape(N, Cin, HW)
        for kh in range(3) for kw in range(3)
    ]
    cols = jnp.concatenate(taps, axis=1)          # (N, 9*Cin, H*W)

    out = pl.pallas_call(
        _conv3x3_relu_kernel,
        out_shape=jax.ShapeDtypeStruct((N, Cout, HW), jnp.float32),
        grid=(1,),  # single step: N handled by a static loop inside the kernel
        in_specs=[
            pl.BlockSpec((N, K, HW), lambda i: (0, 0, 0)),
            pl.BlockSpec((Cout, K), lambda i: (0, 0)),
            pl.BlockSpec((Cout, 1), lambda i: (0, 0)),
        ],
        out_specs=pl.BlockSpec((N, Cout, HW), lambda i: (0, 0, 0)),
    )(cols, _W2, _B2)

    # (N, Cout, H*W) -> (N, Cout, H, W): contiguous reshape, no transpose.
    return out.reshape(N, Cout, H, W)


def wrapper_forward(x):
    """Wrapper.forward: pure pass-through to the wrapped module."""
    return wrapped_forward(x)


if __name__ == "__main__":
    N, C, H, W = 2, 4, 16, 16
    x = jax.random.normal(jax.random.PRNGKey(0), (N, C, H, W), jnp.float32)

    y = wrapper_forward(x)
    y = jax.block_until_ready(y)

    # Cross-check against plain-JAX reference conv + bias + ReLU.
    y_ref = jax.lax.conv_general_dilated(
        x, _WEIGHT, window_strides=(1, 1), padding="SAME",
        dimension_numbers=("NCHW", "OIHW", "NCHW"),
        precision=jax.lax.Precision.HIGHEST)
    y_ref = jnp.maximum(y_ref + _BIAS[None, :, None, None], 0.0)
    assert y.shape == (N, _COUT, H, W)
    assert jnp.allclose(y, y_ref, atol=1e-4, rtol=1e-4)

    print("KERNEL_OK")
</pallas_src>

<mosaic_0001>
module attributes {stable_mosaic.version = 11 : i64} {
  func.func @_conv3x3_relu_kernel(%arg0: i32, %arg1: memref<2x36x256xf32, #tpu.memory_space<vmem>>, %arg2: memref<8x36xf32, #tpu.memory_space<vmem>>, %arg3: memref<8x1xf32, #tpu.memory_space<vmem>>, %arg4: memref<2x8x256xf32, #tpu.memory_space<vmem>>) attributes {dimension_semantics = [#tpu.dimension_semantics<arbitrary>], iteration_bounds = array<i64: 1>, scalar_prefetch = 0 : i64, scratch_operands = 0 : i64, tpu.core_type = #tpu.core_type<tc>, window_params = [{pipeline_mode = #tpu.pipeline_mode<synchronous>, transform_indices = @transform_0, window_bounds = array<i64: 2, 36, 256>}, {pipeline_mode = #tpu.pipeline_mode<synchronous>, transform_indices = @transform_1, window_bounds = array<i64: 8, 36>}, {pipeline_mode = #tpu.pipeline_mode<synchronous>, transform_indices = @transform_2, window_bounds = array<i64: 8, 1>}, {pipeline_mode = #tpu.pipeline_mode<synchronous>, transform_indices = @transform_3, window_bounds = array<i64: 2, 8, 256>}]} {
    %c0 = arith.constant 0 : index
    %c0_0 = arith.constant 0 : index
    %0 = vector.load %arg2[%c0, %c0_0] : memref<8x36xf32, #tpu.memory_space<vmem>>, vector<8x36xf32>
    %c0_1 = arith.constant 0 : index
    %c0_2 = arith.constant 0 : index
    %1 = vector.load %arg3[%c0_1, %c0_2] : memref<8x1xf32, #tpu.memory_space<vmem>>, vector<8x1xf32>
    %c0_3 = arith.constant 0 : index
    %c0_4 = arith.constant 0 : index
    %c0_5 = arith.constant 0 : index
    %2 = vector.load %arg1[%c0_3, %c0_4, %c0_5] : memref<2x36x256xf32, #tpu.memory_space<vmem>>, vector<1x36x256xf32>
    %3 = vector.shape_cast %2 : vector<1x36x256xf32> to vector<36x256xf32>
    %cst = arith.constant dense<0.000000e+00> : vector<8x256xf32>
    %4 = tpu.matmul %0, %3, %cst {dimension_numbers = #tpu.dot_dimension_numbers<[1], [0], [0], [1], [0, 0, 1, 1], [], []>, precision = #tpu.contract_precision<fp32>} : vector<8x36xf32>, vector<36x256xf32>, vector<8x256xf32> -> vector<8x256xf32>
    %5 = vector.broadcast %1 : vector<8x1xf32> to vector<8x256xf32>
    %6 = arith.addf %4, %5 : vector<8x256xf32>
    %cst_6 = arith.constant 0.000000e+00 : f32
    %7 = vector.broadcast %cst_6 : f32 to vector<8x256xf32>
    %8 = arith.maximumf %6, %7 : vector<8x256xf32>
    %c0_7 = arith.constant 0 : index
    %c0_8 = arith.constant 0 : index
    %c0_9 = arith.constant 0 : index
    %9 = vector.load %arg4[%c0_7, %c0_8, %c0_9] : memref<2x8x256xf32, #tpu.memory_space<vmem>>, vector<1x8x256xf32>
    %10 = vector.shape_cast %9 : vector<1x8x256xf32> to vector<8x256xf32>
    %11 = vector.shape_cast %8 : vector<8x256xf32> to vector<1x8x256xf32>
    tpu.vector_store %arg4[%c0_7, %c0_8, %c0_9], %11 {strides = array<i32>} : memref<2x8x256xf32, #tpu.memory_space<vmem>>, vector<1x8x256xf32>,
    %c1 = arith.constant 1 : index
    %c0_10 = arith.constant 0 : index
    %c0_11 = arith.constant 0 : index
    %12 = vector.load %arg1[%c1, %c0_10, %c0_11] : memref<2x36x256xf32, #tpu.memory_space<vmem>>, vector<1x36x256xf32>
    %13 = vector.shape_cast %12 : vector<1x36x256xf32> to vector<36x256xf32>
    %cst_12 = arith.constant dense<0.000000e+00> : vector<8x256xf32>
    %14 = tpu.matmul %0, %13, %cst_12 {dimension_numbers = #tpu.dot_dimension_numbers<[1], [0], [0], [1], [0, 0, 1, 1], [], []>, precision = #tpu.contract_precision<fp32>} : vector<8x36xf32>, vector<36x256xf32>, vector<8x256xf32> -> vector<8x256xf32>
    %15 = vector.broadcast %1 : vector<8x1xf32> to vector<8x256xf32>
    %16 = arith.addf %14, %15 : vector<8x256xf32>
    %cst_13 = arith.constant 0.000000e+00 : f32
    %17 = vector.broadcast %cst_13 : f32 to vector<8x256xf32>
    %18 = arith.maximumf %16, %17 : vector<8x256xf32>
    %c1_14 = arith.constant 1 : index
    %c0_15 = arith.constant 0 : index
    %c0_16 = arith.constant 0 : index
    %19 = vector.load %arg4[%c1_14, %c0_15, %c0_16] : memref<2x8x256xf32, #tpu.memory_space<vmem>>, vector<1x8x256xf32>
    %20 = vector.shape_cast %19 : vector<1x8x256xf32> to vector<8x256xf32>
    %21 = vector.shape_cast %18 : vector<8x256xf32> to vector<1x8x256xf32>
    tpu.vector_store %arg4[%c1_14, %c0_15, %c0_16], %21 {strides = array<i32>} : memref<2x8x256xf32, #tpu.memory_space<vmem>>, vector<1x8x256xf32>,
    return
  }
  func.func @transform_0(%arg0: i32) -> (i32, i32, i32) {
    %c0_i32 = arith.constant 0 : i32
    %c0_i32_0 = arith.constant 0 : i32
    %c0_i32_1 = arith.constant 0 : i32
    %c0_i32_2 = arith.constant 0 : i32
    return %c0_i32, %c0_i32_0, %c0_i32_1 : i32, i32, i32
  }
  func.func @transform_1(%arg0: i32) -> (i32, i32) {
    %c0_i32 = arith.constant 0 : i32
    %c0_i32_0 = arith.constant 0 : i32
    %c0_i32_1 = arith.constant 0 : i32
    return %c0_i32, %c0_i32_0 : i32, i32
  }
  func.func @transform_2(%arg0: i32) -> (i32, i32) {
    %c0_i32 = arith.constant 0 : i32
    %c0_i32_0 = arith.constant 0 : i32
    %c0_i32_1 = arith.constant 0 : i32
    return %c0_i32, %c0_i32_0 : i32, i32
  }
  func.func @transform_3(%arg0: i32) -> (i32, i32, i32) {
    %c0_i32 = arith.constant 0 : i32
    %c0_i32_0 = arith.constant 0 : i32
    %c0_i32_1 = arith.constant 0 : i32
    %c0_i32_2 = arith.constant 0 : i32
    return %c0_i32, %c0_i32_0, %c0_i32_1 : i32, i32, i32
  }
}

</mosaic_0001>

<llo_original>
// kernel: wrapped_forward.1
$region0: #{wrapped_forward.1}
  #allocation0 [shape = 'u32[]', space=smem, size = 0x4, offset = 0x4, fixed_abs, tag = 'smem constant byte address 0x4 - core index']
  #allocation1 [shape = 'u32[144,128]{1,0:T(1,128)}', space=vmem, size = 0x12000, scoped, tag = 'internal scratch']
  %s0 = inlined_call_operand.vmem [shape: f32[2,36,256], index: 0, kind: input, shape index: {}]
  %s1 = inlined_call_operand.vmem [shape: f32[8,36], index: 1, kind: input, shape index: {}]
  %s2 = inlined_call_operand.vmem [shape: f32[8,1], index: 2, kind: input, shape index: {}]
  %s3 = inlined_call_operand.vmem [shape: f32[2,8,256], index: 3, kind: output, shape index: {}]
  %s4 = sld [smem:[#allocation0]]
  $region22: #{wrapped_forward.1} parent=0
    _
  %s6 = ssub.s32 1, %s4
  %s7 = scalar_select 0, %s6, %s4
  // Predicated region
  $region2: #{wrapped_forward.1} parent=0 // pred_check
    _
  $region3: #{wrapped_forward.1} parent=0 // pred_check_branch
    %9 = sbr.rel (0) target = $region5
  $region4: #{wrapped_forward.1} parent=0 // pred_region
    _
  $region5: #{wrapped_forward.1} parent=0 // pred_fallthru
    _
  // Predicated region
  $region6: #{wrapped_forward.1} parent=0 // pred_check
    _
  $region7: #{wrapped_forward.1} parent=0 // pred_check_branch
    %11 = sbr.rel (0) target = $region9
  $region8: #{wrapped_forward.1} parent=0 // pred_region
    _
  $region9: #{wrapped_forward.1} parent=0 // pred_fallthru
    _
  // Predicated region
  $region10: #{wrapped_forward.1} parent=0 // pred_check
    _
  $region11: #{wrapped_forward.1} parent=0 // pred_check_branch
    %13 = sbr.rel (0) target = $region13
  $region12: #{wrapped_forward.1} parent=0 // pred_region
    _
  $region13: #{wrapped_forward.1} parent=0 // pred_fallthru
    _
  %v14 = vld [vmem:[%s1] sm:$0xff]
  %v15 = vld [vmem:[%s2] sm:$0xff]
  %v16 = vld [vmem:[%s0] sm:$0xff]
  %v17 = vld [vmem:[%s0 + $0x8] sm:$0xff]
  %v18 = vld [vmem:[%s0 + $0x10] sm:$0xff]
  %v19 = vld [vmem:[%s0 + $0x18] sm:$0xff]
  %v20 = vld [vmem:[%s0 + $0x20] sm:$0xff]
  %v21 = vld [vmem:[%s0 + $0x28] sm:$0xff]
  %v22 = vld [vmem:[%s0 + $0x30] sm:$0xff]
  %v23 = vld [vmem:[%s0 + $0x38] sm:$0xff]
  %v24 = vld [vmem:[%s0 + $0x40] sm:$0xf]
  %v25 = vld [vmem:[%s0 + $0x48] sm:$0xf]
  %27 = vset.pattern.permute.xlu0 0
  %28 = vperm.xlu0 %27, %v15
  %v29 = vpop.permute.xlu0 %28
  %vm31 = vcmask 293888
  %v33 = vsel %vm31, %v14, 0
  %vm35 = vcmask 1043456
  %v37 = vsel %vm35, %v24, 0
  %v40 = vsel %vm35, %v25, 0
  %42 = vmatprep.subr.mxu0 0.0
  %43 = vmatpush1.msra.mxu0 0.0
  %44 = vmatprep.subr.mxu0 0.0
  %45 = vmatpush1.msra.mxu0 0.0
  %46 = vmatprep.subr.mxu0 0.0
  %47 = vmatpush1.msra.mxu0 0.0
  %48 = vmatprep.subr.mxu0 0.0
  %49 = vmatpush1.msra.mxu0 0.0
  %50 = vmatprep.subr.mxu0 0.0
  %51 = vmatpush1.msra.mxu0 0.0
  %52 = vmatprep.subr.mxu0 0.0
  %53 = vmatpush1.msra.mxu0 0.0
  %54 = vmatprep.subr.mxu0 0.0
  %55 = vmatpush1.msra.mxu0 0.0
  %56 = vmatprep.subr.mxu0 0.0
  %57 = vmatpush1.msra.mxu0 0.0
  %58 = vmatprep.subr.mxu0 0.0
  %59 = vmatpush1.msra.mxu0 0.0
  %60 = vmatprep.subr.mxu0 0.0
  %61 = vmatpush1.msra.mxu0 0.0
  %62 = vmatprep.subr.mxu0 0.0
  %63 = vmatpush1.msra.mxu0 0.0
  %v64 = vand.u32 %v40, 4294901760
  %65 = vmatprep.subr.mxu0 %v64
  %v66 = vand.u32 %v37, 4294901760
  %67 = vmatpush1.msra.mxu0 %v66
  %v68 = vand.u32 %v23, 4294901760
  %69 = vmatprep.subr.mxu0 %v68
  %v70 = vand.u32 %v22, 4294901760
  %71 = vmatpush1.msra.mxu0 %v70
  %v72 = vand.u32 %v21, 4294901760
  %73 = vmatprep.subr.mxu0 %v72
  %v74 = vand.u32 %v20, 4294901760
  %75 = vmatpush1.msra.mxu0 %v74
  %v76 = vand.u32 %v19, 4294901760
  %77 = vmatprep.subr.mxu0 %v76
  %v78 = vand.u32 %v18, 4294901760
  %79 = vmatpush1.msra.mxu0 %v78
  %v80 = vand.u32 %v17, 4294901760
  %81 = vmatprep.subr.mxu0 %v80
  %v82 = vand.u32 %v16, 4294901760
  %83 = vmatpush1.msra.mxu0 %v82
  %84 = vmatprep.subr.mxu0 0.0
  %85 = vmatpush2.msra.mxu0 0.0
  %86 = vmatprep.subr.mxu0 0.0
  %87 = vmatpush2.msra.mxu0 0.0
  %88 = vmatprep.subr.mxu0 0.0
  %89 = vmatpush2.msra.mxu0 0.0
  %90 = vmatprep.subr.mxu0 0.0
  %91 = vmatpush2.msra.mxu0 0.0
  %92 = vmatprep.subr.mxu0 0.0
  %93 = vmatpush2.msra.mxu0 0.0
  %94 = vmatprep.subr.mxu0 0.0
  %95 = vmatpush2.msra.mxu0 0.0
  %96 = vmatprep.subr.mxu0 0.0
  %97 = vmatpush2.msra.mxu0 0.0
  %98 = vmatprep.subr.mxu0 0.0
  %99 = vmatpush2.msra.mxu0 0.0
  %100 = vmatprep.subr.mxu0 0.0
  %101 = vmatpush2.msra.mxu0 0.0
  %102 = vmatprep.subr.mxu0 0.0
  %103 = vmatpush2.msra.mxu0 0.0
  %104 = vmatprep.subr.mxu0 0.0
  %105 = vmatpush2.msra.mxu0 0.0
  %106 = vmatprep.subr.mxu0 0.0
  %107 = vmatpush2.msra.mxu0 0.0
  %108 = vmatprep.subr.mxu0 0.0
  %109 = vmatpush2.msra.mxu0 0.0
  %110 = vmatprep.subr.mxu0 0.0
  %111 = vmatpush2.msra.mxu0 0.0
  %112 = vmatprep.subr.mxu0 0.0
  %113 = vmatpush2.msra.mxu0 0.0
  %114 = vmatprep.subr.mxu0 0.0
  %115 = vmatpush2.msra.mxu0 0.0
  %116 = vmatprep.mubr.f32.mxu0 0.0
  %v117 = vand.u32 %v33, 4294901760
  %v118 = vsub.f32 %v33, %v117
  %v119 = vand.u32 %v118, 4294901760
  %v120 = vsub.f32 %v118, %v119
  %v121 = vand.u32 %v120, 4294901760
  %122 = vmatmul.mubr.f32.gmra.mxu0 %v121
  %v123 = vpop.f32.mrf.mxu0
  %v124 = vadd.f32 %v29, %v123
  %v125 = vpop.f32.mrf.mxu0
  %v126 = vadd.f32 %v29, %v125
  %127 = vdwg.mxu0
  %128 = vmatprep.subr.mxu0 0.0
  %129 = vmatpush1.msra.mxu0 0.0
  %130 = vmatprep.subr.mxu0 0.0
  %131 = vmatpush1.msra.mxu0 0.0
  %132 = vmatprep.subr.mxu0 0.0
  %133 = vmatpush1.msra.mxu0 0.0
  %134 = vmatprep.subr.mxu0 0.0
  %135 = vmatpush1.msra.mxu0 0.0
  %136 = vmatprep.subr.mxu0 0.0
  %137 = vmatpush1.msra.mxu0 0.0
  %138 = vmatprep.subr.mxu0 0.0
  %139 = vmatpush1.msra.mxu0 0.0
  %140 = vmatprep.subr.mxu0 0.0
  %141 = vmatpush1.msra.mxu0 0.0
  %142 = vmatprep.subr.mxu0 0.0
  %143 = vmatpush1.msra.mxu0 0.0
  %144 = vmatprep.subr.mxu0 0.0
  %145 = vmatpush1.msra.mxu0 0.0
  %146 = vmatprep.subr.mxu0 0.0
  %147 = vmatpush1.msra.mxu0 0.0
  %148 = vmatprep.subr.mxu0 0.0
  %149 = vmatpush1.msra.mxu0 0.0
  %v150 = vand.u32 %v40, 4294901760
  %v151 = vsub.f32 %v40, %v150
  %v152 = vand.u32 %v151, 4294901760
  %v153 = vsub.f32 %v151, %v152
  %v154 = vand.u32 %v153, 4294901760
  %155 = vmatprep.subr.mxu0 %v154
  %v156 = vand.u32 %v37, 4294901760
  %v157 = vsub.f32 %v37, %v156
  %v158 = vand.u32 %v157, 4294901760
  %v159 = vsub.f32 %v157, %v158
  %v160 = vand.u32 %v159, 4294901760
  %161 = vmatpush1.msra.mxu0 %v160
  %v162 = vand.u32 %v23, 4294901760
  %v163 = vsub.f32 %v23, %v162
  %v164 = vand.u32 %v163, 4294901760
  %v165 = vsub.f32 %v163, %v164
  %v166 = vand.u32 %v165, 4294901760
  %167 = vmatprep.subr.mxu0 %v166
  %v168 = vand.u32 %v22, 4294901760
  %v169 = vsub.f32 %v22, %v168
  %v170 = vand.u32 %v169, 4294901760
  %v171 = vsub.f32 %v169, %v170
  %v172 = vand.u32 %v171, 4294901760
  %173 = vmatpush1.msra.mxu0 %v172
  %v174 = vand.u32 %v21, 4294901760
  %v175 = vsub.f32 %v21, %v174
  %v176 = vand.u32 %v175, 4294901760
  %v177 = vsub.f32 %v175, %v176
  %v178 = vand.u32 %v177, 4294901760
  %179 = vmatprep.subr.mxu0 %v178
  %v180 = vand.u32 %v20, 4294901760
  %v181 = vsub.f32 %v20, %v180
  %v182 = vand.u32 %v181, 4294901760
  %v183 = vsub.f32 %v181, %v182
  %v184 = vand.u32 %v183, 4294901760
  %185 = vmatpush1.msra.mxu0 %v184
  %v186 = vand.u32 %v19, 4294901760
  %v187 = vsub.f32 %v19, %v186
  %v188 = vand.u32 %v187, 4294901760
  %v189 = vsub.f32 %v187, %v188
  %v190 = vand.u32 %v189, 4294901760
  %191 = vmatprep.subr.mxu0 %v190
  %v192 = vand.u32 %v18, 4294901760
  %v193 = vsub.f32 %v18, %v192
  %v194 = vand.u32 %v193, 4294901760
  %v195 = vsub.f32 %v193, %v194
  %v196 = vand.u32 %v195, 4294901760
  %197 = vmatpush1.msra.mxu0 %v196
  %v198 = vand.u32 %v17, 4294901760
  %v199 = vsub.f32 %v17, %v198
  %v200 = vand.u32 %v199, 4294901760
  %v201 = vsub.f32 %v199, %v200
  %v202 = vand.u32 %v201, 4294901760
  %203 = vmatprep.subr.mxu0 %v202
  %v204 = vand.u32 %v16, 4294901760
  %v205 = vsub.f32 %v16, %v204
  %v206 = vand.u32 %v205, 4294901760
  %v207 = vsub.f32 %v205, %v206
  %v208 = vand.u32 %v207, 4294901760
  %209 = vmatpush1.msra.mxu0 %v208
  %210 = vmatprep.subr.mxu0 0.0
  %211 = vmatpush2.msra.mxu0 0.0
  %212 = vmatprep.subr.mxu0 0.0
  %213 = vmatpush2.msra.mxu0 0.0
  %214 = vmatprep.subr.mxu0 0.0
  %215 = vmatpush2.msra.mxu0 0.0
  %216 = vmatprep.subr.mxu0 0.0
  %217 = vmatpush2.msra.mxu0 0.0
  %218 = vmatprep.subr.mxu0 0.0
  %219 = vmatpush2.msra.mxu0 0.0
  %220 = vmatprep.subr.mxu0 0.0
  %221 = vmatpush2.msra.mxu0 0.0
  %222 = vmatprep.subr.mxu0 0.0
  %223 = vmatpush2.msra.mxu0 0.0
  %224 = vmatprep.subr.mxu0 0.0
  %225 = vmatpush2.msra.mxu0 0.0
  %226 = vmatprep.subr.mxu0 0.0
  %227 = vmatpush2.msra.mxu0 0.0
  %228 = vmatprep.subr.mxu0 0.0
  %229 = vmatpush2.msra.mxu0 0.0
  %230 = vmatprep.subr.mxu0 0.0
  %231 = vmatpush2.msra.mxu0 0.0
  %232 = vmatprep.subr.mxu0 0.0
  %233 = vmatpush2.msra.mxu0 0.0
  %234 = vmatprep.subr.mxu0 0.0
  %235 = vmatpush2.msra.mxu0 0.0
  %236 = vmatprep.subr.mxu0 0.0
  %237 = vmatpush2.msra.mxu0 0.0
  %238 = vmatprep.subr.mxu0 0.0
  %239 = vmatpush2.msra.mxu0 0.0
  %240 = vmatprep.subr.mxu0 0.0
  %241 = vmatpush2.msra.mxu0 0.0
  %242 = vmatprep.mubr.f32.mxu0 0.0
  %v243 = vand.u32 %v33, 4294901760
  %244 = vmatmul.mubr.f32.gmra.mxu0 %v243
  %v245 = vpop.f32.mrf.mxu0
  %v246 = vadd.f32 %v124, %v245
  %v247 = vpop.f32.mrf.mxu0
  %v248 = vadd.f32 %v126, %v247
  %249 = vdwg.mxu0
  %250 = vmatprep.subr.mxu0 0.0
  %251 = vmatpush1.msra.mxu0 0.0
  %252 = vmatprep.subr.mxu0 0.0
  %253 = vmatpush1.msra.mxu0 0.0
  %254 = vmatprep.subr.mxu0 0.0
  %255 = vmatpush1.msra.mxu0 0.0
  %256 = vmatprep.subr.mxu0 0.0
  %257 = vmatpush1.msra.mxu0 0.0
  %258 = vmatprep.subr.mxu0 0.0
  %259 = vmatpush1.msra.mxu0 0.0
  %260 = vmatprep.subr.mxu0 0.0
  %261 = vmatpush1.msra.mxu0 0.0
  %262 = vmatprep.subr.mxu0 0.0
  %263 = vmatpush1.msra.mxu0 0.0
  %264 = vmatprep.subr.mxu0 0.0
  %265 = vmatpush1.msra.mxu0 0.0
  %266 = vmatprep.subr.mxu0 0.0
  %267 = vmatpush1.msra.mxu0 0.0
  %268 = vmatprep.subr.mxu0 0.0
  %269 = vmatpush1.msra.mxu0 0.0
  %270 = vmatprep.subr.mxu0 0.0
  %271 = vmatpush1.msra.mxu0 0.0
  %v272 = vand.u32 %v40, 4294901760
  %v273 = vsub.f32 %v40, %v272
  %274 = vmatprep.subr.mxu0 %v273
  %v275 = vand.u32 %v37, 4294901760
  %v276 = vsub.f32 %v37, %v275
  %277 = vmatpush1.msra.mxu0 %v276
  %v278 = vand.u32 %v23, 4294901760
  %v279 = vsub.f32 %v23, %v278
  %280 = vmatprep.subr.mxu0 %v279
  %v281 = vand.u32 %v22, 4294901760
  %v282 = vsub.f32 %v22, %v281
  %283 = vmatpush1.msra.mxu0 %v282
  %v284 = vand.u32 %v21, 4294901760
  %v285 = vsub.f32 %v21, %v284
  %286 = vmatprep.subr.mxu0 %v285
  %v287 = vand.u32 %v20, 4294901760
  %v288 = vsub.f32 %v20, %v287
  %289 = vmatpush1.msra.mxu0 %v288
  %v290 = vand.u32 %v19, 4294901760
  %v291 = vsub.f32 %v19, %v290
  %292 = vmatprep.subr.mxu0 %v291
  %v293 = vand.u32 %v18, 4294901760
  %v294 = vsub.f32 %v18, %v293
  %295 = vmatpush1.msra.mxu0 %v294
  %v296 = vand.u32 %v17, 4294901760
  %v297 = vsub.f32 %v17, %v296
  %298 = vmatprep.subr.mxu0 %v297
  %v299 = vand.u32 %v16, 4294901760
  %v300 = vsub.f32 %v16, %v299
  %301 = vmatpush1.msra.mxu0 %v300
  %302 = vmatprep.subr.mxu0 0.0
  %303 = vmatpush2.msra.mxu0 0.0
  %304 = vmatprep.subr.mxu0 0.0
  %305 = vmatpush2.msra.mxu0 0.0
  %306 = vmatprep.subr.mxu0 0.0
  %307 = vmatpush2.msra.mxu0 0.0
  %308 = vmatprep.subr.mxu0 0.0
  %309 = vmatpush2.msra.mxu0 0.0
  %310 = vmatprep.subr.mxu0 0.0
  %311 = vmatpush2.msra.mxu0 0.0
  %312 = vmatprep.subr.mxu0 0.0
  %313 = vmatpush2.msra.mxu0 0.0
  %314 = vmatprep.subr.mxu0 0.0
  %315 = vmatpush2.msra.mxu0 0.0
  %316 = vmatprep.subr.mxu0 0.0
  %317 = vmatpush2.msra.mxu0 0.0
  %318 = vmatprep.subr.mxu0 0.0
  %319 = vmatpush2.msra.mxu0 0.0
  %320 = vmatprep.subr.mxu0 0.0
  %321 = vmatpush2.msra.mxu0 0.0
  %322 = vmatprep.subr.mxu0 0.0
  %323 = vmatpush2.msra.mxu0 0.0
  %324 = vmatprep.subr.mxu0 0.0
  %325 = vmatpush2.msra.mxu0 0.0
  %326 = vmatprep.subr.mxu0 0.0
  %327 = vmatpush2.msra.mxu0 0.0
  %328 = vmatprep.subr.mxu0 0.0
  %329 = vmatpush2.msra.mxu0 0.0
  %330 = vmatprep.subr.mxu0 0.0
  %331 = vmatpush2.msra.mxu0 0.0
  %332 = vmatprep.subr.mxu0 0.0
  %333 = vmatpush2.msra.mxu0 0.0
  %334 = vmatprep.mubr.f32.mxu0 0.0
  %v335 = vand.u32 %v33, 4294901760
  %v336 = vsub.f32 %v33, %v335
  %337 = vmatmul.mubr.f32.gmra.mxu0 %v336
  %v338 = vpop.f32.mrf.mxu0
  %v339 = vadd.f32 %v246, %v338
  %v340 = vpop.f32.mrf.mxu0
  %v341 = vadd.f32 %v248, %v340
  %342 = vdwg.mxu0
  %343 = vmatprep.subr.mxu0 0.0
  %344 = vmatpush1.msra.mxu0 0.0
  %345 = vmatprep.subr.mxu0 0.0
  %346 = vmatpush1.msra.mxu0 0.0
  %347 = vmatprep.subr.mxu0 0.0
  %348 = vmatpush1.msra.mxu0 0.0
  %349 = vmatprep.subr.mxu0 0.0
  %350 = vmatpush1.msra.mxu0 0.0
  %351 = vmatprep.subr.mxu0 0.0
  %352 = vmatpush1.msra.mxu0 0.0
  %353 = vmatprep.subr.mxu0 0.0
  %354 = vmatpush1.msra.mxu0 0.0
  %355 = vmatprep.subr.mxu0 0.0
  %356 = vmatpush1.msra.mxu0 0.0
  %357 = vmatprep.subr.mxu0 0.0
  %358 = vmatpush1.msra.mxu0 0.0
  %359 = vmatprep.subr.mxu0 0.0
  %360 = vmatpush1.msra.mxu0 0.0
  %361 = vmatprep.subr.mxu0 0.0
  %362 = vmatpush1.msra.mxu0 0.0
  %363 = vmatprep.subr.mxu0 0.0
  %364 = vmatpush1.msra.mxu0 0.0
  %v365 = vand.u32 %v40, 4294901760
  %366 = vmatprep.subr.mxu0 %v365
  %v367 = vand.u32 %v37, 4294901760
  %368 = vmatpush1.msra.mxu0 %v367
  %v369 = vand.u32 %v23, 4294901760
  %370 = vmatprep.subr.mxu0 %v369
  %v371 = vand.u32 %v22, 4294901760
  %372 = vmatpush1.msra.mxu0 %v371
  %v373 = vand.u32 %v21, 4294901760
  %374 = vmatprep.subr.mxu0 %v373
  %v375 = vand.u32 %v20, 4294901760
  %376 = vmatpush1.msra.mxu0 %v375
  %v377 = vand.u32 %v19, 4294901760
  %378 = vmatprep.subr.mxu0 %v377
  %v379 = vand.u32 %v18, 4294901760
  %380 = vmatpush1.msra.mxu0 %v379
  %v381 = vand.u32 %v17, 4294901760
  %382 = vmatprep.subr.mxu0 %v381
  %v383 = vand.u32 %v16, 4294901760
  %384 = vmatpush1.msra.mxu0 %v383
  %385 = vmatprep.subr.mxu0 0.0
  %386 = vmatpush2.msra.mxu0 0.0
  %387 = vmatprep.subr.mxu0 0.0
  %388 = vmatpush2.msra.mxu0 0.0
  %389 = vmatprep.subr.mxu0 0.0
  %390 = vmatpush2.msra.mxu0 0.0
  %391 = vmatprep.subr.mxu0 0.0
  %392 = vmatpush2.msra.mxu0 0.0
  %393 = vmatprep.subr.mxu0 0.0
  %394 = vmatpush2.msra.mxu0 0.0
  %395 = vmatprep.subr.mxu0 0.0
  %396 = vmatpush2.msra.mxu0 0.0
  %397 = vmatprep.subr.mxu0 0.0
  %398 = vmatpush2.msra.mxu0 0.0
  %399 = vmatprep.subr.mxu0 0.0
  %400 = vmatpush2.msra.mxu0 0.0
  %401 = vmatprep.subr.mxu0 0.0
  %402 = vmatpush2.msra.mxu0 0.0
  %403 = vmatprep.subr.mxu0 0.0
  %404 = vmatpush2.msra.mxu0 0.0
  %405 = vmatprep.subr.mxu0 0.0
  %406 = vmatpush2.msra.mxu0 0.0
  %407 = vmatprep.subr.mxu0 0.0
  %408 = vmatpush2.msra.mxu0 0.0
  %409 = vmatprep.subr.mxu0 0.0
  %410 = vmatpush2.msra.mxu0 0.0
  %411 = vmatprep.subr.mxu0 0.0
  %412 = vmatpush2.msra.mxu0 0.0
  %413 = vmatprep.subr.mxu0 0.0
  %414 = vmatpush2.msra.mxu0 0.0
  %415 = vmatprep.subr.mxu0 0.0
  %416 = vmatpush2.msra.mxu0 0.0
  %417 = vmatprep.mubr.f32.mxu0 0.0
  %v418 = vand.u32 %v33, 4294901760
  %v419 = vsub.f32 %v33, %v418
  %v420 = vand.u32 %v419, 4294901760
  %421 = vmatmul.mubr.f32.gmra.mxu0 %v420
  %v422 = vpop.f32.mrf.mxu0
  %v423 = vadd.f32 %v339, %v422
  %v424 = vpop.f32.mrf.mxu0
  %v425 = vadd.f32 %v341, %v424
  %426 = vdwg.mxu0
  %427 = vmatprep.subr.mxu0 0.0
  %428 = vmatpush1.msra.mxu0 0.0
  %429 = vmatprep.subr.mxu0 0.0
  %430 = vmatpush1.msra.mxu0 0.0
  %431 = vmatprep.subr.mxu0 0.0
  %432 = vmatpush1.msra.mxu0 0.0
  %433 = vmatprep.subr.mxu0 0.0
  %434 = vmatpush1.msra.mxu0 0.0
  %435 = vmatprep.subr.mxu0 0.0
  %436 = vmatpush1.msra.mxu0 0.0
  %437 = vmatprep.subr.mxu0 0.0
  %438 = vmatpush1.msra.mxu0 0.0
  %439 = vmatprep.subr.mxu0 0.0
  %440 = vmatpush1.msra.mxu0 0.0
  %441 = vmatprep.subr.mxu0 0.0
  %442 = vmatpush1.msra.mxu0 0.0
  %443 = vmatprep.subr.mxu0 0.0
  %444 = vmatpush1.msra.mxu0 0.0
  %445 = vmatprep.subr.mxu0 0.0
  %446 = vmatpush1.msra.mxu0 0.0
  %447 = vmatprep.subr.mxu0 0.0
  %448 = vmatpush1.msra.mxu0 0.0
  %v449 = vand.u32 %v40, 4294901760
  %v450 = vsub.f32 %v40, %v449
  %v451 = vand.u32 %v450, 4294901760
  %452 = vmatprep.subr.mxu0 %v451
  %v453 = vand.u32 %v37, 4294901760
  %v454 = vsub.f32 %v37, %v453
  %v455 = vand.u32 %v454, 4294901760
  %456 = vmatpush1.msra.mxu0 %v455
  %v457 = vand.u32 %v23, 4294901760
  %v458 = vsub.f32 %v23, %v457
  %v459 = vand.u32 %v458, 4294901760
  %460 = vmatprep.subr.mxu0 %v459
  %v461 = vand.u32 %v22, 4294901760
  %v462 = vsub.f32 %v22, %v461
  %v463 = vand.u32 %v462, 4294901760
  %464 = vmatpush1.msra.mxu0 %v463
  %v465 = vand.u32 %v21, 4294901760
  %v466 = vsub.f32 %v21, %v465
  %v467 = vand.u32 %v466, 4294901760
  %468 = vmatprep.subr.mxu0 %v467
  %v469 = vand.u32 %v20, 4294901760
  %v470 = vsub.f32 %v20, %v469
  %v471 = vand.u32 %v470, 4294901760
  %472 = vmatpush1.msra.mxu0 %v471
  %v473 = vand.u32 %v19, 4294901760
  %v474 = vsub.f32 %v19, %v473
  %v475 = vand.u32 %v474, 4294901760
  %476 = vmatprep.subr.mxu0 %v475
  %v477 = vand.u32 %v18, 4294901760
  %v478 = vsub.f32 %v18, %v477
  %v479 = vand.u32 %v478, 4294901760
  %480 = vmatpush1.msra.mxu0 %v479
  %v481 = vand.u32 %v17, 4294901760
  %v482 = vsub.f32 %v17, %v481
  %v483 = vand.u32 %v482, 4294901760
  %484 = vmatprep.subr.mxu0 %v483
  %v485 = vand.u32 %v16, 4294901760
  %v486 = vsub.f32 %v16, %v485
  %v487 = vand.u32 %v486, 4294901760
  %488 = vmatpush1.msra.mxu0 %v487
  %489 = vmatprep.subr.mxu0 0.0
  %490 = vmatpush2.msra.mxu0 0.0
  %491 = vmatprep.subr.mxu0 0.0
  %492 = vmatpush2.msra.mxu0 0.0
  %493 = vmatprep.subr.mxu0 0.0
  %494 = vmatpush2.msra.mxu0 0.0
  %495 = vmatprep.subr.mxu0 0.0
  %496 = vmatpush2.msra.mxu0 0.0
  %497 = vmatprep.subr.mxu0 0.0
  %498 = vmatpush2.msra.mxu0 0.0
  %499 = vmatprep.subr.mxu0 0.0
  %500 = vmatpush2.msra.mxu0 0.0
  %501 = vmatprep.subr.mxu0 0.0
  %502 = vmatpush2.msra.mxu0 0.0
  %503 = vmatprep.subr.mxu0 0.0
  %504 = vmatpush2.msra.mxu0 0.0
  %505 = vmatprep.subr.mxu0 0.0
  %506 = vmatpush2.msra.mxu0 0.0
  %507 = vmatprep.subr.mxu0 0.0
  %508 = vmatpush2.msra.mxu0 0.0
  %509 = vmatprep.subr.mxu0 0.0
  %510 = vmatpush2.msra.mxu0 0.0
  %511 = vmatprep.subr.mxu0 0.0
  %512 = vmatpush2.msra.mxu0 0.0
  %513 = vmatprep.subr.mxu0 0.0
  %514 = vmatpush2.msra.mxu0 0.0
  %515 = vmatprep.subr.mxu0 0.0
  %516 = vmatpush2.msra.mxu0 0.0
  %517 = vmatprep.subr.mxu0 0.0
  %518 = vmatpush2.msra.mxu0 0.0
  %519 = vmatprep.subr.mxu0 0.0
  %520 = vmatpush2.msra.mxu0 0.0
  %521 = vmatprep.mubr.f32.mxu0 0.0
  %v522 = vand.u32 %v33, 4294901760
  %523 = vmatmul.mubr.f32.gmra.mxu0 %v522
  %v524 = vpop.f32.mrf.mxu0
  %v525 = vadd.f32 %v423, %v524
  %v526 = vpop.f32.mrf.mxu0
  %v527 = vadd.f32 %v425, %v526
  %528 = vdwg.mxu0
  %529 = vmatprep.subr.mxu0 0.0
  %530 = vmatpush1.msra.mxu0 0.0
  %531 = vmatprep.subr.mxu0 0.0
  %532 = vmatpush1.msra.mxu0 0.0
  %533 = vmatprep.subr.mxu0 0.0
  %534 = vmatpush1.msra.mxu0 0.0
  %535 = vmatprep.subr.mxu0 0.0
  %536 = vmatpush1.msra.mxu0 0.0
  %537 = vmatprep.subr.mxu0 0.0
  %538 = vmatpush1.msra.mxu0 0.0
  %539 = vmatprep.subr.mxu0 0.0
  %540 = vmatpush1.msra.mxu0 0.0
  %541 = vmatprep.subr.mxu0 0.0
  %542 = vmatpush1.msra.mxu0 0.0
  %543 = vmatprep.subr.mxu0 0.0
  %544 = vmatpush1.msra.mxu0 0.0
  %545 = vmatprep.subr.mxu0 0.0
  %546 = vmatpush1.msra.mxu0 0.0
  %547 = vmatprep.subr.mxu0 0.0
  %548 = vmatpush1.msra.mxu0 0.0
  %549 = vmatprep.subr.mxu0 0.0
  %550 = vmatpush1.msra.mxu0 0.0
  %v551 = vand.u32 %v40, 4294901760
  %552 = vmatprep.subr.mxu0 %v551
  %v553 = vand.u32 %v37, 4294901760
  %554 = vmatpush1.msra.mxu0 %v553
  %v555 = vand.u32 %v23, 4294901760
  %556 = vmatprep.subr.mxu0 %v555
  %v557 = vand.u32 %v22, 4294901760
  %558 = vmatpush1.msra.mxu0 %v557
  %v559 = vand.u32 %v21, 4294901760
  %560 = vmatprep.subr.mxu0 %v559
  %v561 = vand.u32 %v20, 4294901760
  %562 = vmatpush1.msra.mxu0 %v561
  %v563 = vand.u32 %v19, 4294901760
  %564 = vmatprep.subr.mxu0 %v563
  %v565 = vand.u32 %v18, 4294901760
  %566 = vmatpush1.msra.mxu0 %v565
  %v567 = vand.u32 %v17, 4294901760
  %568 = vmatprep.subr.mxu0 %v567
  %v569 = vand.u32 %v16, 4294901760
  %570 = vmatpush1.msra.mxu0 %v569
  %571 = vmatprep.subr.mxu0 0.0
  %572 = vmatpush2.msra.mxu0 0.0
  %573 = vmatprep.subr.mxu0 0.0
  %574 = vmatpush2.msra.mxu0 0.0
  %575 = vmatprep.subr.mxu0 0.0
  %576 = vmatpush2.msra.mxu0 0.0
  %577 = vmatprep.subr.mxu0 0.0
  %578 = vmatpush2.msra.mxu0 0.0
  %579 = vmatprep.subr.mxu0 0.0
  %580 = vmatpush2.msra.mxu0 0.0
  %581 = vmatprep.subr.mxu0 0.0
  %582 = vmatpush2.msra.mxu0 0.0
  %583 = vmatprep.subr.mxu0 0.0
  %584 = vmatpush2.msra.mxu0 0.0
  %585 = vmatprep.subr.mxu0 0.0
  %586 = vmatpush2.msra.mxu0 0.0
  %587 = vmatprep.subr.mxu0 0.0
  %588 = vmatpush2.msra.mxu0 0.0
  %589 = vmatprep.subr.mxu0 0.0
  %590 = vmatpush2.msra.mxu0 0.0
  %591 = vmatprep.subr.mxu0 0.0
  %592 = vmatpush2.msra.mxu0 0.0
  %593 = vmatprep.subr.mxu0 0.0
  %594 = vmatpush2.msra.mxu0 0.0
  %595 = vmatprep.subr.mxu0 0.0
  %596 = vmatpush2.msra.mxu0 0.0
  %597 = vmatprep.subr.mxu0 0.0
  %598 = vmatpush2.msra.mxu0 0.0
  %599 = vmatprep.subr.mxu0 0.0
  %600 = vmatpush2.msra.mxu0 0.0
  %601 = vmatprep.subr.mxu0 0.0
  %602 = vmatpush2.msra.mxu0 0.0
  %603 = vmatprep.mubr.f32.mxu0 0.0
  %v604 = vand.u32 %v33, 4294901760
  %605 = vmatmul.mubr.f32.gmra.mxu0 %v604
  %v606 = vpop.f32.mrf.mxu0
  %v607 = vadd.f32 %v525, %v606
  %v608 = vpop.f32.mrf.mxu0
  %v609 = vadd.f32 %v527, %v608
  %610 = vdwg.mxu0
  %v611 = vmax.f32 %v607, 0.0
  %v612 = vmax.f32 %v609, 0.0
  %613 = vst [vmem:[%s3] sm:$0xff] %v611
  %614 = vst [vmem:[%s3 + $0x8] sm:$0xff] %v612
  %s615 = scalar_lea.vmem %s0, 80
  %v616 = vld [vmem:[%s615] sm:$0xff]
  %v617 = vld [vmem:[%s615 + $0x8] sm:$0xff]
  %v618 = vld [vmem:[%s615 + $0x10] sm:$0xff]
  %v619 = vld [vmem:[%s615 + $0x18] sm:$0xff]
  %v620 = vld [vmem:[%s615 + $0x20] sm:$0xff]
  %v621 = vld [vmem:[%s615 + $0x28] sm:$0xff]
  %v622 = vld [vmem:[%s615 + $0x30] sm:$0xff]
  %v623 = vld [vmem:[%s615 + $0x38] sm:$0xff]
  %v624 = vld [vmem:[%s615 + $0x40] sm:$0xf]
  %v625 = vld [vmem:[%s615 + $0x48] sm:$0xf]
  %v627 = vsel %vm35, %v624, 0
  %v630 = vsel %vm35, %v625, 0
  %632 = vmatprep.subr.mxu0 0.0
  %633 = vmatpush1.msra.mxu0 0.0
  %634 = vmatprep.subr.mxu0 0.0
  %635 = vmatpush1.msra.mxu0 0.0
  %636 = vmatprep.subr.mxu0 0.0
  %637 = vmatpush1.msra.mxu0 0.0
  %638 = vmatprep.subr.mxu0 0.0
  %639 = vmatpush1.msra.mxu0 0.0
  %640 = vmatprep.subr.mxu0 0.0
  %641 = vmatpush1.msra.mxu0 0.0
  %642 = vmatprep.subr.mxu0 0.0
  %643 = vmatpush1.msra.mxu0 0.0
  %644 = vmatprep.subr.mxu0 0.0
  %645 = vmatpush1.msra.mxu0 0.0
  %646 = vmatprep.subr.mxu0 0.0
  %647 = vmatpush1.msra.mxu0 0.0
  %648 = vmatprep.subr.mxu0 0.0
  %649 = vmatpush1.msra.mxu0 0.0
  %650 = vmatprep.subr.mxu0 0.0
  %651 = vmatpush1.msra.mxu0 0.0
  %652 = vmatprep.subr.mxu0 0.0
  %653 = vmatpush1.msra.mxu0 0.0
  %v654 = vand.u32 %v630, 4294901760
  %655 = vmatprep.subr.mxu0 %v654
  %v656 = vand.u32 %v627, 4294901760
  %657 = vmatpush1.msra.mxu0 %v656
  %v658 = vand.u32 %v623, 4294901760
  %659 = vmatprep.subr.mxu0 %v658
  %v660 = vand.u32 %v622, 4294901760
  %661 = vmatpush1.msra.mxu0 %v660
  %v662 = vand.u32 %v621, 4294901760
  %663 = vmatprep.subr.mxu0 %v662
  %v664 = vand.u32 %v620, 4294901760
  %665 = vmatpush1.msra.mxu0 %v664
  %v666 = vand.u32 %v619, 4294901760
  %667 = vmatprep.subr.mxu0 %v666
  %v668 = vand.u32 %v618, 4294901760
  %669 = vmatpush1.msra.mxu0 %v668
  %v670 = vand.u32 %v617, 4294901760
  %671 = vmatprep.subr.mxu0 %v670
  %v672 = vand.u32 %v616, 4294901760
  %673 = vmatpush1.msra.mxu0 %v672
  %674 = vmatprep.subr.mxu0 0.0
  %675 = vmatpush2.msra.mxu0 0.0
  %676 = vmatprep.subr.mxu0 0.0
  %677 = vmatpush2.msra.mxu0 0.0
  %678 = vmatprep.subr.mxu0 0.0
  %679 = vmatpush2.msra.mxu0 0.0
  %680 = vmatprep.subr.mxu0 0.0
  %681 = vmatpush2.msra.mxu0 0.0
  %682 = vmatprep.subr.mxu0 0.0
  %683 = vmatpush2.msra.mxu0 0.0
  %684 = vmatprep.subr.mxu0 0.0
  %685 = vmatpush2.msra.mxu0 0.0
  %686 = vmatprep.subr.mxu0 0.0
  %687 = vmatpush2.msra.mxu0 0.0
  %688 = vmatprep.subr.mxu0 0.0
  %689 = vmatpush2.msra.mxu0 0.0
  %690 = vmatprep.subr.mxu0 0.0
  %691 = vmatpush2.msra.mxu0 0.0
  %692 = vmatprep.subr.mxu0 0.0
  %693 = vmatpush2.msra.mxu0 0.0
  %694 = vmatprep.subr.mxu0 0.0
  %695 = vmatpush2.msra.mxu0 0.0
  %696 = vmatprep.subr.mxu0 0.0
  %697 = vmatpush2.msra.mxu0 0.0
  %698 = vmatprep.subr.mxu0 0.0
  %699 = vmatpush2.msra.mxu0 0.0
  %700 = vmatprep.subr.mxu0 0.0
  %701 = vmatpush2.msra.mxu0 0.0
  %702 = vmatprep.subr.mxu0 0.0
  %703 = vmatpush2.msra.mxu0 0.0
  %704 = vmatprep.subr.mxu0 0.0
  %705 = vmatpush2.msra.mxu0 0.0
  %706 = vmatprep.mubr.f32.mxu0 0.0
  %v707 = vand.u32 %v33, 4294901760
  %v708 = vsub.f32 %v33, %v707
  %v709 = vand.u32 %v708, 4294901760
  %v710 = vsub.f32 %v708, %v709
  %v711 = vand.u32 %v710, 4294901760
  %712 = vmatmul.mubr.f32.gmra.mxu0 %v711
  %v713 = vpop.f32.mrf.mxu0
  %v714 = vadd.f32 %v29, %v713
  %v715 = vpop.f32.mrf.mxu0
  %v716 = vadd.f32 %v29, %v715
  %717 = vdwg.mxu0
  %718 = vmatprep.subr.mxu0 0.0
  %719 = vmatpush1.msra.mxu0 0.0
  %720 = vmatprep.subr.mxu0 0.0
  %721 = vmatpush1.msra.mxu0 0.0
  %722 = vmatprep.subr.mxu0 0.0
  %723 = vmatpush1.msra.mxu0 0.0
  %724 = vmatprep.subr.mxu0 0.0
  %725 = vmatpush1.msra.mxu0 0.0
  %726 = vmatprep.subr.mxu0 0.0
  %727 = vmatpush1.msra.mxu0 0.0
  %728 = vmatprep.subr.mxu0 0.0
  %729 = vmatpush1.msra.mxu0 0.0
  %730 = vmatprep.subr.mxu0 0.0
  %731 = vmatpush1.msra.mxu0 0.0
  %732 = vmatprep.subr.mxu0 0.0
  %733 = vmatpush1.msra.mxu0 0.0
  %734 = vmatprep.subr.mxu0 0.0
  %735 = vmatpush1.msra.mxu0 0.0
  %736 = vmatprep.subr.mxu0 0.0
  %737 = vmatpush1.msra.mxu0 0.0
  %738 = vmatprep.subr.mxu0 0.0
  %739 = vmatpush1.msra.mxu0 0.0
  %v740 = vand.u32 %v630, 4294901760
  %v741 = vsub.f32 %v630, %v740
  %v742 = vand.u32 %v741, 4294901760
  %v743 = vsub.f32 %v741, %v742
  %v744 = vand.u32 %v743, 4294901760
  %745 = vmatprep.subr.mxu0 %v744
  %v746 = vand.u32 %v627, 4294901760
  %v747 = vsub.f32 %v627, %v746
  %v748 = vand.u32 %v747, 4294901760
  %v749 = vsub.f32 %v747, %v748
  %v750 = vand.u32 %v749, 4294901760
  %751 = vmatpush1.msra.mxu0 %v750
  %v752 = vand.u32 %v623, 4294901760
  %v753 = vsub.f32 %v623, %v752
  %v754 = vand.u32 %v753, 4294901760
  %v755 = vsub.f32 %v753, %v754
  %v756 = vand.u32 %v755, 4294901760
  %757 = vmatprep.subr.mxu0 %v756
  %v758 = vand.u32 %v622, 4294901760
  %v759 = vsub.f32 %v622, %v758
  %v760 = vand.u32 %v759, 4294901760
  %v761 = vsub.f32 %v759, %v760
  %v762 = vand.u32 %v761, 4294901760
  %763 = vmatpush1.msra.mxu0 %v762
  %v764 = vand.u32 %v621, 4294901760
  %v765 = vsub.f32 %v621, %v764
  %v766 = vand.u32 %v765, 4294901760
  %v767 = vsub.f32 %v765, %v766
  %v768 = vand.u32 %v767, 4294901760
  %769 = vmatprep.subr.mxu0 %v768
  %v770 = vand.u32 %v620, 4294901760
  %v771 = vsub.f32 %v620, %v770
  %v772 = vand.u32 %v771, 4294901760
  %v773 = vsub.f32 %v771, %v772
  %v774 = vand.u32 %v773, 4294901760
  %775 = vmatpush1.msra.mxu0 %v774
  %v776 = vand.u32 %v619, 4294901760
  %v777 = vsub.f32 %v619, %v776
  %v778 = vand.u32 %v777, 4294901760
  %v779 = vsub.f32 %v777, %v778
  %v780 = vand.u32 %v779, 4294901760
  %781 = vmatprep.subr.mxu0 %v780
  %v782 = vand.u32 %v618, 4294901760
  %v783 = vsub.f32 %v618, %v782
  %v784 = vand.u32 %v783, 4294901760
  %v785 = vsub.f32 %v783, %v784
  %v786 = vand.u32 %v785, 4294901760
  %787 = vmatpush1.msra.mxu0 %v786
  %v788 = vand.u32 %v617, 4294901760
  %v789 = vsub.f32 %v617, %v788
  %v790 = vand.u32 %v789, 4294901760
  %v791 = vsub.f32 %v789, %v790
  %v792 = vand.u32 %v791, 4294901760
  %793 = vmatprep.subr.mxu0 %v792
  %v794 = vand.u32 %v616, 4294901760
  %v795 = vsub.f32 %v616, %v794
  %v796 = vand.u32 %v795, 4294901760
  %v797 = vsub.f32 %v795, %v796
  %v798 = vand.u32 %v797, 4294901760
  %799 = vmatpush1.msra.mxu0 %v798
  %800 = vmatprep.subr.mxu0 0.0
  %801 = vmatpush2.msra.mxu0 0.0
  %802 = vmatprep.subr.mxu0 0.0
  %803 = vmatpush2.msra.mxu0 0.0
  %804 = vmatprep.subr.mxu0 0.0
  %805 = vmatpush2.msra.mxu0 0.0
  %806 = vmatprep.subr.mxu0 0.0
  %807 = vmatpush2.msra.mxu0 0.0
  %808 = vmatprep.subr.mxu0 0.0
  %809 = vmatpush2.msra.mxu0 0.0
  %810 = vmatprep.subr.mxu0 0.0
  %811 = vmatpush2.msra.mxu0 0.0
  %812 = vmatprep.subr.mxu0 0.0
  %813 = vmatpush2.msra.mxu0 0.0
  %814 = vmatprep.subr.mxu0 0.0
  %815 = vmatpush2.msra.mxu0 0.0
  %816 = vmatprep.subr.mxu0 0.0
  %817 = vmatpush2.msra.mxu0 0.0
  %818 = vmatprep.subr.mxu0 0.0
  %819 = vmatpush2.msra.mxu0 0.0
  %820 = vmatprep.subr.mxu0 0.0
  %821 = vmatpush2.msra.mxu0 0.0
  %822 = vmatprep.subr.mxu0 0.0
  %823 = vmatpush2.msra.mxu0 0.0
  %824 = vmatprep.subr.mxu0 0.0
  %825 = vmatpush2.msra.mxu0 0.0
  %826 = vmatprep.subr.mxu0 0.0
  %827 = vmatpush2.msra.mxu0 0.0
  %828 = vmatprep.subr.mxu0 0.0
  %829 = vmatpush2.msra.mxu0 0.0
  %830 = vmatprep.subr.mxu0 0.0
  %831 = vmatpush2.msra.mxu0 0.0
  %832 = vmatprep.mubr.f32.mxu0 0.0
  %v833 = vand.u32 %v33, 4294901760
  %834 = vmatmul.mubr.f32.gmra.mxu0 %v833
  %v835 = vpop.f32.mrf.mxu0
  %v836 = vadd.f32 %v714, %v835
  %v837 = vpop.f32.mrf.mxu0
  %v838 = vadd.f32 %v716, %v837
  %839 = vdwg.mxu0
  %840 = vmatprep.subr.mxu0 0.0
  %841 = vmatpush1.msra.mxu0 0.0
  %842 = vmatprep.subr.mxu0 0.0
  %843 = vmatpush1.msra.mxu0 0.0
  %844 = vmatprep.subr.mxu0 0.0
  %845 = vmatpush1.msra.mxu0 0.0
  %846 = vmatprep.subr.mxu0 0.0
  %847 = vmatpush1.msra.mxu0 0.0
  %848 = vmatprep.subr.mxu0 0.0
  %849 = vmatpush1.msra.mxu0 0.0
  %850 = vmatprep.subr.mxu0 0.0
  %851 = vmatpush1.msra.mxu0 0.0
  %852 = vmatprep.subr.mxu0 0.0
  %853 = vmatpush1.msra.mxu0 0.0
  %854 = vmatprep.subr.mxu0 0.0
  %855 = vmatpush1.msra.mxu0 0.0
  %856 = vmatprep.subr.mxu0 0.0
  %857 = vmatpush1.msra.mxu0 0.0
  %858 = vmatprep.subr.mxu0 0.0
  %859 = vmatpush1.msra.mxu0 0.0
  %860 = vmatprep.subr.mxu0 0.0
  %861 = vmatpush1.msra.mxu0 0.0
  %v862 = vand.u32 %v630, 4294901760
  %v863 = vsub.f32 %v630, %v862
  %864 = vmatprep.subr.mxu0 %v863
  %v865 = vand.u32 %v627, 4294901760
  %v866 = vsub.f32 %v627, %v865
  %867 = vmatpush1.msra.mxu0 %v866
  %v868 = vand.u32 %v623, 4294901760
  %v869 = vsub.f32 %v623, %v868
  %870 = vmatprep.subr.mxu0 %v869
  %v871 = vand.u32 %v622, 4294901760
  %v872 = vsub.f32 %v622, %v871
  %873 = vmatpush1.msra.mxu0 %v872
  %v874 = vand.u32 %v621, 4294901760
  %v875 = vsub.f32 %v621, %v874
  %876 = vmatprep.subr.mxu0 %v875
  %v877 = vand.u32 %v620, 4294901760
  %v878 = vsub.f32 %v620, %v877
  %879 = vmatpush1.msra.mxu0 %v878
  %v880 = vand.u32 %v619, 4294901760
  %v881 = vsub.f32 %v619, %v880
  %882 = vmatprep.subr.mxu0 %v881
  %v883 = vand.u32 %v618, 4294901760
  %v884 = vsub.f32 %v618, %v883
  %885 = vmatpush1.msra.mxu0 %v884
  %v886 = vand.u32 %v617, 4294901760
  %v887 = vsub.f32 %v617, %v886
  %888 = vmatprep.subr.mxu0 %v887
  %v889 = vand.u32 %v616, 4294901760
  %v890 = vsub.f32 %v616, %v889
  %891 = vmatpush1.msra.mxu0 %v890
  %892 = vmatprep.subr.mxu0 0.0
  %893 = vmatpush2.msra.mxu0 0.0
  %894 = vmatprep.subr.mxu0 0.0
  %895 = vmatpush2.msra.mxu0 0.0
  %896 = vmatprep.subr.mxu0 0.0
  %897 = vmatpush2.msra.mxu0 0.0
  %898 = vmatprep.subr.mxu0 0.0
  %899 = vmatpush2.msra.mxu0 0.0
  %900 = vmatprep.subr.mxu0 0.0
  %901 = vmatpush2.msra.mxu0 0.0
  %902 = vmatprep.subr.mxu0 0.0
  %903 = vmatpush2.msra.mxu0 0.0
  %904 = vmatprep.subr.mxu0 0.0
  %905 = vmatpush2.msra.mxu0 0.0
  %906 = vmatprep.subr.mxu0 0.0
  %907 = vmatpush2.msra.mxu0 0.0
  %908 = vmatprep.subr.mxu0 0.0
  %909 = vmatpush2.msra.mxu0 0.0
  %910 = vmatprep.subr.mxu0 0.0
  %911 = vmatpush2.msra.mxu0 0.0
  %912 = vmatprep.subr.mxu0 0.0
  %913 = vmatpush2.msra.mxu0 0.0
  %914 = vmatprep.subr.mxu0 0.0
  %915 = vmatpush2.msra.mxu0 0.0
  %916 = vmatprep.subr.mxu0 0.0
  %917 = vmatpush2.msra.mxu0 0.0
  %918 = vmatprep.subr.mxu0 0.0
  %919 = vmatpush2.msra.mxu0 0.0
  %920 = vmatprep.subr.mxu0 0.0
  %921 = vmatpush2.msra.mxu0 0.0
  %922 = vmatprep.subr.mxu0 0.0
  %923 = vmatpush2.msra.mxu0 0.0
  %924 = vmatprep.mubr.f32.mxu0 0.0
  %v925 = vand.u32 %v33, 4294901760
  %v926 = vsub.f32 %v33, %v925
  %927 = vmatmul.mubr.f32.gmra.mxu0 %v926
  %v928 = vpop.f32.mrf.mxu0
  %v929 = vadd.f32 %v836, %v928
  %v930 = vpop.f32.mrf.mxu0
  %v931 = vadd.f32 %v838, %v930
  %932 = vdwg.mxu0
  %933 = vmatprep.subr.mxu0 0.0
  %934 = vmatpush1.msra.mxu0 0.0
  %935 = vmatprep.subr.mxu0 0.0
  %936 = vmatpush1.msra.mxu0 0.0
  %937 = vmatprep.subr.mxu0 0.0
  %938 = vmatpush1.msra.mxu0 0.0
  %939 = vmatprep.subr.mxu0 0.0
  %940 = vmatpush1.msra.mxu0 0.0
  %941 = vmatprep.subr.mxu0 0.0
  %942 = vmatpush1.msra.mxu0 0.0
  %943 = vmatprep.subr.mxu0 0.0
  %944 = vmatpush1.msra.mxu0 0.0
  %945 = vmatprep.subr.mxu0 0.0
  %946 = vmatpush1.msra.mxu0 0.0
  %947 = vmatprep.subr.mxu0 0.0
  %948 = vmatpush1.msra.mxu0 0.0
  %949 = vmatprep.subr.mxu0 0.0
  %950 = vmatpush1.msra.mxu0 0.0
  %951 = vmatprep.subr.mxu0 0.0
  %952 = vmatpush1.msra.mxu0 0.0
  %953 = vmatprep.subr.mxu0 0.0
  %954 = vmatpush1.msra.mxu0 0.0
  %v955 = vand.u32 %v630, 4294901760
  %956 = vmatprep.subr.mxu0 %v955
  %v957 = vand.u32 %v627, 4294901760
  %958 = vmatpush1.msra.mxu0 %v957
  %v959 = vand.u32 %v623, 4294901760
  %960 = vmatprep.subr.mxu0 %v959
  %v961 = vand.u32 %v622, 4294901760
  %962 = vmatpush1.msra.mxu0 %v961
  %v963 = vand.u32 %v621, 4294901760
  %964 = vmatprep.subr.mxu0 %v963
  %v965 = vand.u32 %v620, 4294901760
  %966 = vmatpush1.msra.mxu0 %v965
  %v967 = vand.u32 %v619, 4294901760
  %968 = vmatprep.subr.mxu0 %v967
  %v969 = vand.u32 %v618, 4294901760
  %970 = vmatpush1.msra.mxu0 %v969
  %v971 = vand.u32 %v617, 4294901760
  %972 = vmatprep.subr.mxu0 %v971
  %v973 = vand.u32 %v616, 4294901760
  %974 = vmatpush1.msra.mxu0 %v973
  %975 = vmatprep.subr.mxu0 0.0
  %976 = vmatpush2.msra.mxu0 0.0
  %977 = vmatprep.subr.mxu0 0.0
  %978 = vmatpush2.msra.mxu0 0.0
  %979 = vmatprep.subr.mxu0 0.0
  %980 = vmatpush2.msra.mxu0 0.0
  %981 = vmatprep.subr.mxu0 0.0
  %982 = vmatpush2.msra.mxu0 0.0
  %983 = vmatprep.subr.mxu0 0.0
  %984 = vmatpush2.msra.mxu0 0.0
  %985 = vmatprep.subr.mxu0 0.0
  %986 = vmatpush2.msra.mxu0 0.0
  %987 = vmatprep.subr.mxu0 0.0
  %988 = vmatpush2.msra.mxu0 0.0
  %989 = vmatprep.subr.mxu0 0.0
  %990 = vmatpush2.msra.mxu0 0.0
  %991 = vmatprep.subr.mxu0 0.0
  %992 = vmatpush2.msra.mxu0 0.0
  %993 = vmatprep.subr.mxu0 0.0
  %994 = vmatpush2.msra.mxu0 0.0
  %995 = vmatprep.subr.mxu0 0.0
  %996 = vmatpush2.msra.mxu0 0.0
  %997 = vmatprep.subr.mxu0 0.0
  %998 = vmatpush2.msra.mxu0 0.0
  %999 = vmatprep.subr.mxu0 0.0
  %1000 = vmatpush2.msra.mxu0 0.0
  %1001 = vmatprep.subr.mxu0 0.0
  %1002 = vmatpush2.msra.mxu0 0.0
  %1003 = vmatprep.subr.mxu0 0.0
  %1004 = vmatpush2.msra.mxu0 0.0
  %1005 = vmatprep.subr.mxu0 0.0
  %1006 = vmatpush2.msra.mxu0 0.0
  %1007 = vmatprep.mubr.f32.mxu0 0.0
  %v1008 = vand.u32 %v33, 4294901760
  %v1009 = vsub.f32 %v33, %v1008
  %v1010 = vand.u32 %v1009, 4294901760
  %1011 = vmatmul.mubr.f32.gmra.mxu0 %v1010
  %v1012 = vpop.f32.mrf.mxu0
  %v1013 = vadd.f32 %v929, %v1012
  %v1014 = vpop.f32.mrf.mxu0
  %v1015 = vadd.f32 %v931, %v1014
  %1016 = vdwg.mxu0
  %1017 = vmatprep.subr.mxu0 0.0
  %1018 = vmatpush1.msra.mxu0 0.0
  %1019 = vmatprep.subr.mxu0 0.0
  %1020 = vmatpush1.msra.mxu0 0.0
  %1021 = vmatprep.subr.mxu0 0.0
  %1022 = vmatpush1.msra.mxu0 0.0
  %1023 = vmatprep.subr.mxu0 0.0
  %1024 = vmatpush1.msra.mxu0 0.0
  %1025 = vmatprep.subr.mxu0 0.0
  %1026 = vmatpush1.msra.mxu0 0.0
  %1027 = vmatprep.subr.mxu0 0.0
  %1028 = vmatpush1.msra.mxu0 0.0
  %1029 = vmatprep.subr.mxu0 0.0
  %1030 = vmatpush1.msra.mxu0 0.0
  %1031 = vmatprep.subr.mxu0 0.0
  %1032 = vmatpush1.msra.mxu0 0.0
  %1033 = vmatprep.subr.mxu0 0.0
  %1034 = vmatpush1.msra.mxu0 0.0
  %1035 = vmatprep.subr.mxu0 0.0
  %1036 = vmatpush1.msra.mxu0 0.0
  %1037 = vmatprep.subr.mxu0 0.0
  %1038 = vmatpush1.msra.mxu0 0.0
  %v1039 = vand.u32 %v630, 4294901760
  %v1040 = vsub.f32 %v630, %v1039
  %v1041 = vand.u32 %v1040, 4294901760
  %1042 = vmatprep.subr.mxu0 %v1041
  %v1043 = vand.u32 %v627, 4294901760
  %v1044 = vsub.f32 %v627, %v1043
  %v1045 = vand.u32 %v1044, 4294901760
  %1046 = vmatpush1.msra.mxu0 %v1045
  %v1047 = vand.u32 %v623, 4294901760
  %v1048 = vsub.f32 %v623, %v1047
  %v1049 = vand.u32 %v1048, 4294901760
  %1050 = vmatprep.subr.mxu0 %v1049
  %v1051 = vand.u32 %v622, 4294901760
  %v1052 = vsub.f32 %v622, %v1051
  %v1053 = vand.u32 %v1052, 4294901760
  %1054 = vmatpush1.msra.mxu0 %v1053
  %v1055 = vand.u32 %v621, 4294901760
  %v1056 = vsub.f32 %v621, %v1055
  %v1057 = vand.u32 %v1056, 4294901760
  %1058 = vmatprep.subr.mxu0 %v1057
  %v1059 = vand.u32 %v620, 4294901760
  %v1060 = vsub.f32 %v620, %v1059
  %v1061 = vand.u32 %v1060, 4294901760
  %1062 = vmatpush1.msra.mxu0 %v1061
  %v1063 = vand.u32 %v619, 4294901760
  %v1064 = vsub.f32 %v619, %v1063
  %v1065 = vand.u32 %v1064, 4294901760
  %1066 = vmatprep.subr.mxu0 %v1065
  %v1067 = vand.u32 %v618, 4294901760
  %v1068 = vsub.f32 %v618, %v1067
  %v1069 = vand.u32 %v1068, 4294901760
  %1070 = vmatpush1.msra.mxu0 %v1069
  %v1071 = vand.u32 %v617, 4294901760
  %v1072 = vsub.f32 %v617, %v1071
  %v1073 = vand.u32 %v1072, 4294901760
  %1074 = vmatprep.subr.mxu0 %v1073
  %v1075 = vand.u32 %v616, 4294901760
  %v1076 = vsub.f32 %v616, %v1075
  %v1077 = vand.u32 %v1076, 4294901760
  %1078 = vmatpush1.msra.mxu0 %v1077
  %1079 = vmatprep.subr.mxu0 0.0
  %1080 = vmatpush2.msra.mxu0 0.0
  %1081 = vmatprep.subr.mxu0 0.0
  %1082 = vmatpush2.msra.mxu0 0.0
  %1083 = vmatprep.subr.mxu0 0.0
  %1084 = vmatpush2.msra.mxu0 0.0
  %1085 = vmatprep.subr.mxu0 0.0
  %1086 = vmatpush2.msra.mxu0 0.0
  %1087 = vmatprep.subr.mxu0 0.0
  %1088 = vmatpush2.msra.mxu0 0.0
  %1089 = vmatprep.subr.mxu0 0.0
  %1090 = vmatpush2.msra.mxu0 0.0
  %1091 = vmatprep.subr.mxu0 0.0
  %1092 = vmatpush2.msra.mxu0 0.0
  %1093 = vmatprep.subr.mxu0 0.0
  %1094 = vmatpush2.msra.mxu0 0.0
  %1095 = vmatprep.subr.mxu0 0.0
  %1096 = vmatpush2.msra.mxu0 0.0
  %1097 = vmatprep.subr.mxu0 0.0
  %1098 = vmatpush2.msra.mxu0 0.0
  %1099 = vmatprep.subr.mxu0 0.0
  %1100 = vmatpush2.msra.mxu0 0.0
  %1101 = vmatprep.subr.mxu0 0.0
  %1102 = vmatpush2.msra.mxu0 0.0
  %1103 = vmatprep.subr.mxu0 0.0
  %1104 = vmatpush2.msra.mxu0 0.0
  %1105 = vmatprep.subr.mxu0 0.0
  %1106 = vmatpush2.msra.mxu0 0.0
  %1107 = vmatprep.subr.mxu0 0.0
  %1108 = vmatpush2.msra.mxu0 0.0
  %1109 = vmatprep.subr.mxu0 0.0
  %1110 = vmatpush2.msra.mxu0 0.0
  %1111 = vmatprep.mubr.f32.mxu0 0.0
  %v1112 = vand.u32 %v33, 4294901760
  %1113 = vmatmul.mubr.f32.gmra.mxu0 %v1112
  %v1114 = vpop.f32.mrf.mxu0
  %v1115 = vadd.f32 %v1013, %v1114
  %v1116 = vpop.f32.mrf.mxu0
  %v1117 = vadd.f32 %v1015, %v1116
  %1118 = vdwg.mxu0
  %1119 = vmatprep.subr.mxu0 0.0
  %1120 = vmatpush1.msra.mxu0 0.0
  %1121 = vmatprep.subr.mxu0 0.0
  %1122 = vmatpush1.msra.mxu0 0.0
  %1123 = vmatprep.subr.mxu0 0.0
  %1124 = vmatpush1.msra.mxu0 0.0
  %1125 = vmatprep.subr.mxu0 0.0
  %1126 = vmatpush1.msra.mxu0 0.0
  %1127 = vmatprep.subr.mxu0 0.0
  %1128 = vmatpush1.msra.mxu0 0.0
  %1129 = vmatprep.subr.mxu0 0.0
  %1130 = vmatpush1.msra.mxu0 0.0
  %1131 = vmatprep.subr.mxu0 0.0
  %1132 = vmatpush1.msra.mxu0 0.0
  %1133 = vmatprep.subr.mxu0 0.0
  %1134 = vmatpush1.msra.mxu0 0.0
  %1135 = vmatprep.subr.mxu0 0.0
  %1136 = vmatpush1.msra.mxu0 0.0
  %1137 = vmatprep.subr.mxu0 0.0
  %1138 = vmatpush1.msra.mxu0 0.0
  %1139 = vmatprep.subr.mxu0 0.0
  %1140 = vmatpush1.msra.mxu0 0.0
  %v1141 = vand.u32 %v630, 4294901760
  %1142 = vmatprep.subr.mxu0 %v1141
  %v1143 = vand.u32 %v627, 4294901760
  %1144 = vmatpush1.msra.mxu0 %v1143
  %v1145 = vand.u32 %v623, 4294901760
  %1146 = vmatprep.subr.mxu0 %v1145
  %v1147 = vand.u32 %v622, 4294901760
  %1148 = vmatpush1.msra.mxu0 %v1147
  %v1149 = vand.u32 %v621, 4294901760
  %1150 = vmatprep.subr.mxu0 %v1149
  %v1151 = vand.u32 %v620, 4294901760
  %1152 = vmatpush1.msra.mxu0 %v1151
  %v1153 = vand.u32 %v619, 4294901760
  %1154 = vmatprep.subr.mxu0 %v1153
  %v1155 = vand.u32 %v618, 4294901760
  %1156 = vmatpush1.msra.mxu0 %v1155
  %v1157 = vand.u32 %v617, 4294901760
  %1158 = vmatprep.subr.mxu0 %v1157
  %v1159 = vand.u32 %v616, 4294901760
  %1160 = vmatpush1.msra.mxu0 %v1159
  %1161 = vmatprep.subr.mxu0 0.0
  %1162 = vmatpush2.msra.mxu0 0.0
  %1163 = vmatprep.subr.mxu0 0.0
  %1164 = vmatpush2.msra.mxu0 0.0
  %1165 = vmatprep.subr.mxu0 0.0
  %1166 = vmatpush2.msra.mxu0 0.0
  %1167 = vmatprep.subr.mxu0 0.0
  %1168 = vmatpush2.msra.mxu0 0.0
  %1169 = vmatprep.subr.mxu0 0.0
  %1170 = vmatpush2.msra.mxu0 0.0
  %1171 = vmatprep.subr.mxu0 0.0
  %1172 = vmatpush2.msra.mxu0 0.0
  %1173 = vmatprep.subr.mxu0 0.0
  %1174 = vmatpush2.msra.mxu0 0.0
  %1175 = vmatprep.subr.mxu0 0.0
  %1176 = vmatpush2.msra.mxu0 0.0
  %1177 = vmatprep.subr.mxu0 0.0
  %1178 = vmatpush2.msra.mxu0 0.0
  %1179 = vmatprep.subr.mxu0 0.0
  %1180 = vmatpush2.msra.mxu0 0.0
  %1181 = vmatprep.subr.mxu0 0.0
  %1182 = vmatpush2.msra.mxu0 0.0
  %1183 = vmatprep.subr.mxu0 0.0
  %1184 = vmatpush2.msra.mxu0 0.0
  %1185 = vmatprep.subr.mxu0 0.0
  %1186 = vmatpush2.msra.mxu0 0.0
  %1187 = vmatprep.subr.mxu0 0.0
  %1188 = vmatpush2.msra.mxu0 0.0
  %1189 = vmatprep.subr.mxu0 0.0
  %1190 = vmatpush2.msra.mxu0 0.0
  %1191 = vmatprep.subr.mxu0 0.0
  %1192 = vmatpush2.msra.mxu0 0.0
  %1193 = vmatprep.mubr.f32.mxu0 0.0
  %v1194 = vand.u32 %v33, 4294901760
  %1195 = vmatmul.mubr.f32.gmra.mxu0 %v1194
  %v1196 = vpop.f32.mrf.mxu0
  %v1197 = vadd.f32 %v1115, %v1196
  %v1198 = vpop.f32.mrf.mxu0
  %v1199 = vadd.f32 %v1117, %v1198
  %1200 = vdwg.mxu0
  %v1201 = vmax.f32 %v1197, 0.0
  %v1202 = vmax.f32 %v1199, 0.0
  %s1203 = scalar_lea.vmem %s3, 16
  %1204 = vst [vmem:[%s1203] sm:$0xff] %v1201
  %1205 = vst [vmem:[%s1203 + $0x8] sm:$0xff] %v1202
  // Predicated region
  $region14: #{wrapped_forward.1} parent=0 // pred_check
    _
  $region15: #{wrapped_forward.1} parent=0 // pred_check_branch
    %1207 = sbr.rel (0) target = $region17
  $region16: #{wrapped_forward.1} parent=0 // pred_region
    _
  $region17: #{wrapped_forward.1} parent=0 // pred_fallthru
    _
  // Predicated region
  $region18: #{wrapped_forward.1} parent=0 // pred_check
    _
  $region19: #{wrapped_forward.1} parent=0 // pred_check_branch
    %1209 = sbr.rel (0) target = $region21
  $region20: #{wrapped_forward.1} parent=0 // pred_region
    _
  $region21: #{wrapped_forward.1} parent=0 // pred_fallthru
    _

</llo_original>
